<compile_context>
chip_gen: v7x
topology: tpu7x:2x2x1
jax: 0.10.0
libtpu: 0.0.40
codegen_flags: <defaults>
</compile_context>

<pallas_src>
import jax
import jax.numpy as jnp
from jax.experimental import pallas as pl
from jax.experimental.pallas import tpu as pltpu


def wscale_kernel(scale_ref, b_ref, x_ref, o_ref):
    # scale_ref: SMEM (1,) float32 scalar
    # b_ref:     VMEM float32 bias tile, broadcast-compatible with x_ref
    # x_ref:     VMEM activation tile (lane-dense)
    scale = scale_ref[0]
    y = x_ref[...].astype(jnp.float32) * scale + b_ref[...]
    o_ref[...] = y.astype(o_ref.dtype)


def _cdiv(a, b):
    return -(-a // b)


def _sublane_min(itemsize):
    # Sub-32-bit dtypes pack along sublanes: native min tile rows per width.
    if itemsize >= 4:
        return 8
    if itemsize == 2:
        return 16
    return 32


def _budget_bytes():
    """Generation-gated (block_bytes, vmem_limit_bytes)."""
    try:
        vmem = pltpu.get_tpu_info().vmem_capacity_bytes
    except Exception:
        vmem = None
    if vmem is not None and vmem > 64 * 1024 * 1024:
        # v5e / v6e: 128 MiB physical VMEM -> larger tiles amortize the
        # ~0.35us per-grid-step overhead.
        return 6 * 1024 * 1024, 64 * 1024 * 1024
    # v7x (64 MiB per TC) or unknown: keep the double-buffered pipeline
    # footprint (~4x block + bias buffers) comfortably under ~28 MiB.
    return 3 * 1024 * 1024, 28 * 1024 * 1024


def _choose_block(R, L, itemsize, target_bytes):
    """(8,128)-legal (br, bl): widest lane block first, minimum sublane count."""
    sub = _sublane_min(itemsize)
    if L % 128 == 0:
        # Longest contiguous HBM runs: maximize the lane extent at `sub` rows.
        max_lanes = max(128, (target_bytes // (sub * itemsize)) // 128 * 128)
        bl = min(L, max_lanes)
        if bl == L and R > sub:
            # Whole rows fit in a block: spend the rest of the budget on rows.
            max_rows = max(sub, (target_bytes // (bl * itemsize)) // sub * sub)
            br = min(R, max_rows)
        else:
            br = R if R <= sub else sub
    else:
        # Non-128-aligned minor dim: full L is the only legal lane extent.
        # Keep the sublane count minimal so the block stays near the budget.
        # TODO(synk): large unaligned H*W maps are better fused into the
        # adjacent conv epilogue than handled as a standalone kernel.
        bl = L
        br = R if R <= sub else sub

    # v7x has two TensorCores; with "parallel" axes an even row-block count
    # (>= 2) keeps both busy.  Only adjust when R is splittable.
    if R >= 2 * sub:
        gr, gl = _cdiv(R, br), _cdiv(L, bl)
        if gr * gl < 2 or (gr > 1 and gr % 2 != 0):
            gr_t = max(2, ((gr + 1) // 2) * 2)
            br_t = max(sub, _cdiv(_cdiv(R, gr_t), sub) * sub)
            if _cdiv(R, br_t) % 2 == 0:
                br = br_t
    return br, bl


def wscale_forward(x, scale, b, *, donate_x=False):
    """x: (N, C, H, W); scale: (1,); b: (C,). Returns x*scale + b[None,:,None,None]."""
    N, C, H, W = x.shape
    HW = H * W
    itemsize = jnp.dtype(x.dtype).itemsize

    # scale stays f32 in SMEM (32-bit scalar memory); cast/compute in-kernel.
    scale_f32 = scale.astype(jnp.float32).reshape((1,))

    # ---- layout selection (plain-JAX plumbing, fused by XLA) -----------------
    channel_minor = (HW % 128 != 0) and (C % 128 == 0)
    if channel_minor:
        # Lanes = C: (N, C, H, W) -> (N*H*W, C); bias is a (1, C) lane vector.
        R, L = N * HW, C
        x2 = jnp.transpose(x, (0, 2, 3, 1)).reshape(R, L)
        b2 = b.astype(jnp.float32).reshape(1, C)
        bias_spec = lambda br, bl: pl.BlockSpec((1, bl), lambda i, j: (0, j))
    else:
        # Lanes = H*W: (N, C, H, W) -> (N*C, H*W); bias is a (R, 1) column.
        # Row r = n*C + c needs b[c] -> tile b across the batch dimension.
        R, L = N * C, HW
        x2 = x.reshape(R, L)
        b2 = jnp.tile(b.astype(jnp.float32), N).reshape(R, 1)
        bias_spec = lambda br, bl: pl.BlockSpec((br, 1), lambda i, j: (i, 0))

    target_bytes, vmem_limit = _budget_bytes()
    br, bl = _choose_block(R, L, itemsize, target_bytes)
    grid = (_cdiv(R, br), _cdiv(L, bl))

    # Unaligned-L fallback can exceed the budget; make sure the scoped VMEM
    # limit still covers the double-buffered pipeline instead of failing.
    vmem_limit = max(vmem_limit,
                     min(4 * br * bl * itemsize + (1 << 20), 100 * 1024 * 1024))

    out2 = pl.pallas_call(
        wscale_kernel,
        out_shape=jax.ShapeDtypeStruct((R, L), x.dtype),
        grid=grid,
        in_specs=[
            pl.BlockSpec(memory_space=pltpu.MemorySpace.SMEM),  # scale (f32 scalar)
            bias_spec(br, bl),                                  # bias
            pl.BlockSpec((br, bl), lambda i, j: (i, j)),        # x tile
        ],
        out_specs=pl.BlockSpec((br, bl), lambda i, j: (i, j)),
        compiler_params=pltpu.CompilerParams(
            dimension_semantics=("parallel", "parallel"),
            vmem_limit_bytes=vmem_limit,
        ),
        input_output_aliases=({2: 0} if donate_x else {}),
    )(scale_f32, b2, x2)

    if channel_minor:
        return out2.reshape(N, H, W, C).transpose(0, 3, 1, 2)
    return out2.reshape(N, C, H, W)


if __name__ == "__main__":
    # Small NCHW feature map consistent with the module's forward.
    N, C, H, W = 2, 4, 16, 16

    key = jax.random.PRNGKey(0)
    kx, ks, kb = jax.random.split(key, 3)

    x = jax.random.normal(kx, (N, C, H, W), dtype=jnp.float32)
    scale = jax.random.normal(ks, (1,), dtype=jnp.float32)   # torch.randn([1]) analog
    b = jax.random.normal(kb, (C,), dtype=jnp.float32)       # torch.randn(size) analog

    y = jax.block_until_ready(wscale_forward(x, scale, b))

    # Plain-JAX reference.
    y_ref = x * scale[0] + b.reshape(1, C, 1, 1)
    assert y.shape == x.shape
    assert jnp.allclose(y, y_ref, atol=1e-6, rtol=1e-6)

    print("KERNEL_OK")
</pallas_src>

<mosaic_0001>
module attributes {stable_mosaic.version = 11 : i64} {
  func.func @wscale_kernel(%arg0: i32, %arg1: i32, %arg2: memref<1xf32, #tpu.memory_space<smem>>, %arg3: memref<8x1xf32, #tpu.memory_space<vmem>>, %arg4: memref<8x256xf32, #tpu.memory_space<vmem>>, %arg5: memref<8x256xf32, #tpu.memory_space<vmem>>) attributes {dimension_semantics = [#tpu.dimension_semantics<parallel>, #tpu.dimension_semantics<parallel>], iteration_bounds = array<i64: 1, 1>, scalar_prefetch = 0 : i64, scratch_operands = 0 : i64, tpu.core_type = #tpu.core_type<tc>, window_params = [{transform_indices = @transform_0, window_bounds = array<i64: 1>}, {transform_indices = @transform_1, window_bounds = array<i64: 8, 1>}, {transform_indices = @transform_2, window_bounds = array<i64: 8, 256>}, {transform_indices = @transform_3, window_bounds = array<i64: 8, 256>}]} {
    %c0 = arith.constant 0 : index
    %0 = memref.load %arg2[%c0] : memref<1xf32, #tpu.memory_space<smem>>
    %c0_0 = arith.constant 0 : index
    %c0_1 = arith.constant 0 : index
    %1 = vector.load %arg4[%c0_0, %c0_1] : memref<8x256xf32, #tpu.memory_space<vmem>>, vector<8x256xf32>
    %2 = vector.broadcast %0 : f32 to vector<8x256xf32>
    %3 = arith.mulf %1, %2 : vector<8x256xf32>
    %c0_2 = arith.constant 0 : index
    %c0_3 = arith.constant 0 : index
    %4 = vector.load %arg3[%c0_2, %c0_3] : memref<8x1xf32, #tpu.memory_space<vmem>>, vector<8x1xf32>
    %5 = vector.broadcast %4 : vector<8x1xf32> to vector<8x256xf32>
    %6 = arith.addf %3, %5 : vector<8x256xf32>
    %c0_4 = arith.constant 0 : index
    %c0_5 = arith.constant 0 : index
    %7 = vector.load %arg5[%c0_4, %c0_5] : memref<8x256xf32, #tpu.memory_space<vmem>>, vector<8x256xf32>
    tpu.vector_store %arg5[%c0_4, %c0_5], %6 {strides = array<i32>} : memref<8x256xf32, #tpu.memory_space<vmem>>, vector<8x256xf32>,
    return
  }
  func.func @transform_0(%arg0: i32, %arg1: i32) -> i32 {
    %c0_i32 = arith.constant 0 : i32
    %c0_i32_0 = arith.constant 0 : i32
    return %c0_i32 : i32
  }
  func.func @transform_1(%arg0: i32, %arg1: i32) -> (i32, i32) {
    %c0_i32 = arith.constant 0 : i32
    %c0_i32_0 = arith.constant 0 : i32
    return %arg0, %c0_i32 : i32, i32
  }
  func.func @transform_2(%arg0: i32, %arg1: i32) -> (i32, i32) {
    %c0_i32 = arith.constant 0 : i32
    return %arg0, %arg1 : i32, i32
  }
  func.func @transform_3(%arg0: i32, %arg1: i32) -> (i32, i32) {
    %c0_i32 = arith.constant 0 : i32
    return %arg0, %arg1 : i32, i32
  }
}

</mosaic_0001>

<llo_original>
// kernel: tpu_custom_call.1
$region0: #{tpu_custom_call.1}
  #allocation0 [shape = 'u32[]', space=smem, size = 0x4, offset = 0x4, fixed_abs, tag = 'smem constant byte address 0x4 - core index']
  #allocation1 [shape = 'u32[144,128]{1,0:T(1,128)}', space=vmem, size = 0x12000, scoped, tag = 'internal scratch']
  #allocation2 [shape = 'f32[1]{0:T(128)S(6)}', space=smem, size = 0x200, scoped, tag = 'scoped memory for tpu_custom_call.1']
  %s0 = inlined_call_operand.<no memory space> [shape: f32[1], index: 0, kind: input, shape index: {}]
  %s1 = inlined_call_operand.vmem [shape: f32[8,1], index: 1, kind: input, shape index: {}]
  %s2 = inlined_call_operand.vmem [shape: f32[8,256], index: 2, kind: input, shape index: {}]
  %s3 = inlined_call_operand.hbm [shape: f32[8,256], index: 3, kind: output, shape index: {}]
  %s4 = sld [smem:[#allocation0]]
  $region22: #{tpu_custom_call.1} parent=0
    _
  %s6 = ssub.s32 1, %s4
  %s7 = scalar_select 0, %s6, %s4
  %8 = sst [smem:[#allocation2]] %s0
  $region1: #{tpu_custom_call.1} parent=0
    #allocation3 [shape = 'u8[8192]{0}', space=vmem, size = 0x2000, scoped, tag = 'output window, operand 0, single buffered']
    #allocation4 [shape = 's32[1]{0}', space=sflag, size = 0x4, scoped, tag = 'scoped memory for tpu_custom_call.1']
    %9 = vsyncpa [#allocation4], 0
    // Predicated region
    $region2: #{tpu_custom_call.1} parent=1 // pred_check
      _
    $region3: #{tpu_custom_call.1} parent=1 // pred_check_branch
      %11 = sbr.rel (0) target = $region5
    $region4: #{tpu_custom_call.1} parent=1 // pred_region
      _
    $region5: #{tpu_custom_call.1} parent=1 // pred_fallthru
      _
    // Predicated region
    $region6: #{tpu_custom_call.1} parent=1 // pred_check
      _
    $region7: #{tpu_custom_call.1} parent=1 // pred_check_branch
      %13 = sbr.rel (0) target = $region9
    $region8: #{tpu_custom_call.1} parent=1 // pred_region
      _
    $region9: #{tpu_custom_call.1} parent=1 // pred_fallthru
      _
    // Predicated region
    $region10: #{tpu_custom_call.1} parent=1 // pred_check
      _
    $region11: #{tpu_custom_call.1} parent=1 // pred_check_branch
      %15 = sbr.rel (0) target = $region13
    $region12: #{tpu_custom_call.1} parent=1 // pred_region
      _
    $region13: #{tpu_custom_call.1} parent=1 // pred_fallthru
      _
    %s16 = sld [smem:[#allocation2]]
    %v17 = vld [vmem:[%s2] sm:$0xff]
    %v18 = vld [vmem:[%s2 + $0x8] sm:$0xff]
    %v19 = vstv %s16
    %v20 = vmul.f32 %v17, %v19
    %v21 = vmul.f32 %v18, %v19
    %v22 = vld [vmem:[%s1] sm:$0xff]
    %24 = vset.pattern.permute.xlu0 0
    %25 = vperm.xlu0 %24, %v22
    %v26 = vpop.permute.xlu0 %25
    %v28 = vadd.f32 %v20, %v26
    %v29 = vadd.f32 %v21, %v26
    %30 = vst [vmem:[#allocation3] sm:$0xff] %v28
    %31 = vst [vmem:[#allocation3 + $0x8] sm:$0xff] %v29
    // Predicated region
    $region14: #{tpu_custom_call.1} parent=1 // pred_check
      _
    $region15: #{tpu_custom_call.1} parent=1 // pred_check_branch
      %33 = sbr.rel (0) target = $region17
    $region16: #{tpu_custom_call.1} parent=1 // pred_region
      %s35 = ssub.s32 256, 256
      %36 = vsyncadd [#allocation4], %s35
      %s38 = sshll.u32 [#allocation3], 4
      %s39 = int_to_ptr.vmem [resolvable:$true] %s38
      %41 = dma.vmem_to_hbm [thread:$0]  %s39, 256, %s3, [#allocation4]
    $region17: #{tpu_custom_call.1} parent=1 // pred_fallthru
      _
    // Predicated region
    $region18: #{tpu_custom_call.1} parent=1 // pred_check
      _
    $region19: #{tpu_custom_call.1} parent=1 // pred_check_branch
      %43 = sbr.rel (0) target = $region21
    $region20: #{tpu_custom_call.1} parent=1 // pred_region
      %44 = dma.done [#allocation4], 256
    $region21: #{tpu_custom_call.1} parent=1 // pred_fallthru
      _
    %45 = vsyncpa [#allocation4], 1

</llo_original>
